<compile_context>
chip_gen: v7x
topology: tpu7x:2x2x1
jax: 0.10.0
libtpu: 0.0.40
codegen_flags: <defaults>
</compile_context>

<pallas_src>
import jax
import jax.numpy as jnp
from jax.experimental import pallas as pl
from jax.experimental.pallas import tpu as pltpu


def _round_up(v, m):
    return ((v + m - 1) // m) * m


def _choose_tile_b(B, D, P, F):
    """Batch rows per grid step.

    Big enough to amortize the ~600-cycle fixed per-grid-step pipeline cost,
    small enough that the double-buffered x tile plus the (2D+F, tile_b)
    intermediates stay within a few MiB of VMEM (v7x: 64 MiB/TC physical, v5e
    scoped default: 16 MiB).  For B >= 256 at least two grid steps are emitted
    so dimension_semantics=("parallel",) can split the batch over v7x's 2 TCs.
    """
    if B <= 256:
        return B
    # f32 bytes per batch row that scale with the tile: x (double-buffered),
    # one-hot, pre/h activations, output (double-buffered), idx.
    bytes_per_row = 4 * (2 * D + P + 2 * (2 * D + F) + 2 * F + 4)
    tile = (8 << 20) // bytes_per_row                  # ~8 MiB of tile-scaled VMEM
    tile = max(1024, min(32768, tile))
    tile = min(tile, _round_up(pl.cdiv(B, 2), 128))    # guarantee >= 2 grid steps
    return (tile // 128) * 128


def _make_literal_kernel(multi_regressor: bool, d2: int):
    def kernel(idx_ref, x_ref, wx_ref, gp_ref, b1_ref, w2h_ref, b2_ref, o_ref):
        # Shapes (feature-major activations; tB = batch tile on the lane axis):
        #   idx_ref : (1, tB)    int32
        #   x_ref   : (tB, D)    f32   native layout; contracted over D
        #   wx_ref  : (2D+F, D)  f32   rows [:2D] = W1[:, :D], rows [2D:] = W2[:, :D]
        #   gp_ref  : (2D+F, P)  f32   rows [:2D] = W1[:, D:] @ emb.T,
        #                              rows [2D:] = W2[:, D:] @ emb.T
        #   b1_ref  : (2D, 1)    f32
        #   w2h_ref : (2D, 1) f32 when F == 1, else (F, 2D) f32
        #   b2_ref  : (F, 1)     f32
        #   o_ref   : (F, tB)    f32   lane-dense output
        P = gp_ref.shape[1]
        tB = idx_ref.shape[1]

        # --- fused embedding gather: one_hot(idx) on the MXU ------------------
        # Out-of-range idx (<0 or >=P) yields an all-zero one-hot column, i.e. a
        # zero embedding (PyTorch's nn.Embedding would raise instead).
        # TODO(synk): for large P switch to a scalar-prefetch / DMA row gather;
        # the one-hot contraction scales K linearly with P.
        idx = idx_ref[...]                                        # (1, tB)
        prop = jax.lax.broadcasted_iota(jnp.int32, (P, tB), 0)    # (P, tB)
        onehot = (prop == idx).astype(jnp.float32)                # (P, tB)

        # --- fc1 (+ stacked fc2 "t" contributions), concat-free ----------------
        #   pre[:2D] = W1[:, :D] @ x.T + (W1[:, D:] @ emb.T) @ onehot
        #   pre[2D:] = W2[:, :D] @ x.T + (W2[:, D:] @ emb.T) @ onehot
        pre = jax.lax.dot_general(
            wx_ref[...], x_ref[...],
            dimension_numbers=(((1,), (1,)), ((), ())),
            preferred_element_type=jnp.float32)                   # (2D+F, tB)
        pre = pre + jnp.dot(gp_ref[...], onehot,
                            preferred_element_type=jnp.float32)   # (2D+F, tB)

        hT = jnp.maximum(pre[:d2] + b1_ref[...], 0.0)             # (2D, tB)
        # Dropout(p=0.3) is identity at inference.
        # TODO(synk): training-mode dropout (stochastic mask) not implemented.
        t2 = pre[d2:]                                             # (F, tB) = W2 @ t.T

        # --- fc2 on (h + t) -----------------------------------------------------
        if multi_regressor:
            outT = (jnp.dot(w2h_ref[...], hT, preferred_element_type=jnp.float32)
                    + t2 + b2_ref[...])                           # (F, tB)
        else:
            # F == 1: VPU multiply + sublane reduce keeps the MXU free and the
            # (1, tB) result lane-dense (unmasked vst).
            outT = (jnp.sum(hT * w2h_ref[...], axis=0, keepdims=True)
                    + t2 + b2_ref[...])                           # (1, tB)
        o_ref[...] = outT.astype(o_ref.dtype)

    return kernel


def literal_embeddings_forward(x, relation_idx, params, multi_regressor=False):
    """Forward pass of LiteralEmbeddings (inference).

    x:            (B, D) float32 head-entity embeddings
    relation_idx: (B,)   int     data-property indices
    params:       PyTorch-orientation parameters (see init_params)
    returns:      (B,) when multi_regressor=False, else (B, num_props)
    """
    hp = jax.lax.Precision.HIGHEST
    emb = params["emb"].astype(jnp.float32)             # (P, D)
    w1 = params["w1"].astype(jnp.float32)                # (2D, 2D) (out, in)
    b1 = params["b1"].astype(jnp.float32)                # (2D,)
    w2 = params["w2"].astype(jnp.float32)                # (F, 2D)  (out, in)
    b2 = params["b2"].astype(jnp.float32)                # (F,)

    B, D = x.shape
    P = emb.shape[0]
    F_out = w2.shape[0]
    D2 = 2 * D

    tile_b = _choose_tile_b(B, D, P, F_out)
    num_tiles = pl.cdiv(B, tile_b)          # ragged last block handled by Pallas

    x32 = x.astype(jnp.float32)                          # native (B, D) layout
    idx = relation_idx.astype(jnp.int32).reshape(1, B)   # (1, B): tiny, lane-major

    # Fold every rel-dependent term into per-property tables so the kernel never
    # materializes the gathered embedding; stack the fc2 x/rel halves under the
    # fc1 halves so one dot per operand covers both layers' "t" contributions.
    wx = jnp.concatenate([w1[:, :D], w2[:, :D]], axis=0)            # (2D+F, D)
    gp = jnp.concatenate([jnp.dot(w1[:, D:], emb.T, precision=hp),
                          jnp.dot(w2[:, D:], emb.T, precision=hp)],
                         axis=0)                                    # (2D+F, P)
    b1c = b1.reshape(D2, 1)
    b2c = b2.reshape(F_out, 1)
    w2h = w2 if multi_regressor else w2.reshape(D2, 1)   # (F, 2D) or (2D, 1)

    out_shape = jax.ShapeDtypeStruct((F_out, B), jnp.float32)
    const = lambda a: pl.BlockSpec(a.shape, lambda i: (0,) * a.ndim)

    cost = pl.CostEstimate(
        flops=int(2 * B * ((D2 + F_out) * (D + P) + F_out * D2) + 4 * B * D2),
        transcendentals=0,
        bytes_accessed=int(4 * (B * (D + F_out + 1)
                                + (D2 + F_out) * (D + P) + D2 + F_out + w2h.size)),
    )

    out = pl.pallas_call(
        _make_literal_kernel(multi_regressor, D2),
        out_shape=out_shape,
        grid=(num_tiles,),
        in_specs=[
            pl.BlockSpec((1, tile_b), lambda i: (0, i)),   # relation idx (tiled)
            pl.BlockSpec((tile_b, D), lambda i: (i, 0)),   # x, native layout (tiled)
            const(wx),                                     # fc1/fc2 x-half weights
            const(gp),                                     # fc1/fc2 per-property tables
            const(b1c),                                    # fc1 bias
            const(w2h),                                    # fc2 weight for the h term
            const(b2c),                                    # fc2 bias
        ],
        out_specs=pl.BlockSpec((F_out, tile_b), lambda i: (0, i)),
        compiler_params=pltpu.CompilerParams(
            # Batch tiles are independent -> shard across v7x's 2 TensorCores.
            dimension_semantics=("parallel",),
            # Raise v5e's 16 MiB scoped default; stays under v7x's 64 MiB/TC.
            vmem_limit_bytes=40 * 1024 * 1024,
        ),
        cost_estimate=cost,
    )(idx, x32, wx, gp, b1c, w2h, b2c)

    if multi_regressor:
        return out.T                                      # (B, F)
    return out[0]                                         # (B,)


def init_params(key, num_of_data_properties, embedding_dims, multi_regressor=False):
    """Parameters in PyTorch orientation: Linear weights are (out_features, in_features)."""
    out_features = num_of_data_properties if multi_regressor else 1
    d2 = 2 * embedding_dims
    k1, k2, k3, k4, k5 = jax.random.split(key, 5)
    s = 1.0 / jnp.sqrt(d2)
    return {
        "emb": jax.random.normal(k1, (num_of_data_properties, embedding_dims), jnp.float32),
        "w1": jax.random.uniform(k2, (d2, d2), jnp.float32, -s, s),
        "b1": jax.random.uniform(k3, (d2,), jnp.float32, -s, s),
        "w2": jax.random.uniform(k4, (out_features, d2), jnp.float32, -s, s),
        "b2": jax.random.uniform(k5, (out_features,), jnp.float32, -s, s),
    }


def _reference(x, relation_idx, params, multi_regressor=False):
    # Pure-JAX reference of the PyTorch module (f32, highest matmul precision).
    hp = jax.lax.Precision.HIGHEST
    rel = jnp.take(params["emb"], relation_idx, axis=0)
    t = jnp.concatenate([x, rel], axis=-1)
    h = jnp.maximum(jnp.dot(t, params["w1"].T, precision=hp) + params["b1"], 0.0)
    out = jnp.dot(h + t, params["w2"].T, precision=hp) + params["b2"]
    return out if multi_regressor else out.reshape(-1)


if __name__ == "__main__":
    # Small shapes consistent with the module's forward.
    B = 8        # batch of (entity, data-property) pairs
    D = 32       # embedding_dims
    P = 6        # num_of_data_properties

    key = jax.random.PRNGKey(0)
    kx, kr, kp, kq = jax.random.split(key, 4)

    x = jax.random.normal(kx, (B, D), jnp.float32)
    relation_idx = jax.random.randint(kr, (B,), 0, P, jnp.int32)

    fwd = jax.jit(literal_embeddings_forward, static_argnames=("multi_regressor",))

    # --- single-output regressor (module default) ----------------------------
    params = init_params(kp, P, D, multi_regressor=False)
    out = jax.block_until_ready(fwd(x, relation_idx, params, multi_regressor=False))
    ref = _reference(x, relation_idx, params, multi_regressor=False)
    assert out.shape == (B,)
    assert jnp.allclose(out, ref, atol=1e-2, rtol=1e-2)

    # --- multi-regressor head -------------------------------------------------
    params_m = init_params(kq, P, D, multi_regressor=True)
    out_m = jax.block_until_ready(fwd(x, relation_idx, params_m, multi_regressor=True))
    ref_m = _reference(x, relation_idx, params_m, multi_regressor=True)
    assert out_m.shape == (B, P)
    assert jnp.allclose(out_m, ref_m, atol=1e-2, rtol=1e-2)

    print("KERNEL_OK")
</pallas_src>

<mosaic_0001>
module attributes {stable_mosaic.version = 11 : i64} {
  func.func @kernel(%arg0: i32, %arg1: memref<1x8xi32, #tpu.memory_space<vmem>>, %arg2: memref<8x32xf32, #tpu.memory_space<vmem>>, %arg3: memref<65x32xf32, #tpu.memory_space<vmem>>, %arg4: memref<65x6xf32, #tpu.memory_space<vmem>>, %arg5: memref<64x1xf32, #tpu.memory_space<vmem>>, %arg6: memref<64x1xf32, #tpu.memory_space<vmem>>, %arg7: memref<1x1xf32, #tpu.memory_space<vmem>>, %arg8: memref<1x8xf32, #tpu.memory_space<vmem>>) attributes {dimension_semantics = [#tpu.dimension_semantics<parallel>], iteration_bounds = array<i64: 1>, scalar_prefetch = 0 : i64, scratch_operands = 0 : i64, tpu.core_type = #tpu.core_type<tc>, window_params = [{transform_indices = @transform_0, window_bounds = array<i64: 1, 8>}, {transform_indices = @transform_1, window_bounds = array<i64: 8, 32>}, {pipeline_mode = #tpu.pipeline_mode<synchronous>, transform_indices = @transform_2, window_bounds = array<i64: 65, 32>}, {pipeline_mode = #tpu.pipeline_mode<synchronous>, transform_indices = @transform_3, window_bounds = array<i64: 65, 6>}, {pipeline_mode = #tpu.pipeline_mode<synchronous>, transform_indices = @transform_4, window_bounds = array<i64: 64, 1>}, {pipeline_mode = #tpu.pipeline_mode<synchronous>, transform_indices = @transform_5, window_bounds = array<i64: 64, 1>}, {pipeline_mode = #tpu.pipeline_mode<synchronous>, transform_indices = @transform_6, window_bounds = array<i64: 1, 1>}, {transform_indices = @transform_7, window_bounds = array<i64: 1, 8>}]} {
    %c0 = arith.constant 0 : index
    %c0_0 = arith.constant 0 : index
    %0 = vector.load %arg1[%c0, %c0_0] : memref<1x8xi32, #tpu.memory_space<vmem>>, vector<1x8xi32>
    %1 = tpu.iota {dimensions = array<i32: 0>} : vector<6x8xi32>
    %2 = vector.broadcast %0 : vector<1x8xi32> to vector<6x8xi32>
    %3 = arith.cmpi eq, %1, %2 : vector<6x8xi32>
    %4 = arith.extui %3 : vector<6x8xi1> to vector<6x8xi32>
    %5 = arith.sitofp %4 : vector<6x8xi32> to vector<6x8xf32>
    %c0_1 = arith.constant 0 : index
    %c0_2 = arith.constant 0 : index
    %6 = vector.load %arg3[%c0_1, %c0_2] : memref<65x32xf32, #tpu.memory_space<vmem>>, vector<65x32xf32>
    %c0_3 = arith.constant 0 : index
    %c0_4 = arith.constant 0 : index
    %7 = vector.load %arg2[%c0_3, %c0_4] : memref<8x32xf32, #tpu.memory_space<vmem>>, vector<8x32xf32>
    %cst = arith.constant dense<0.000000e+00> : vector<65x8xf32>
    %8 = tpu.matmul %6, %7, %cst {dimension_numbers = #tpu.dot_dimension_numbers<[1], [1], [0], [0], [0, 0, 1, 0], [], []>} : vector<65x32xf32>, vector<8x32xf32>, vector<65x8xf32> -> vector<65x8xf32>
    %c0_5 = arith.constant 0 : index
    %c0_6 = arith.constant 0 : index
    %9 = vector.load %arg4[%c0_5, %c0_6] : memref<65x6xf32, #tpu.memory_space<vmem>>, vector<65x6xf32>
    %cst_7 = arith.constant dense<0.000000e+00> : vector<65x8xf32>
    %10 = tpu.matmul %9, %5, %cst_7 {dimension_numbers = #tpu.dot_dimension_numbers<[1], [0], [0], [1], [0, 0, 1, 1], [], []>} : vector<65x6xf32>, vector<6x8xf32>, vector<65x8xf32> -> vector<65x8xf32>
    %11 = arith.addf %8, %10 : vector<65x8xf32>
    %12 = vector.extract_strided_slice %11 {offsets = [0, 0], sizes = [64, 8], strides = [1, 1]} : vector<65x8xf32> to vector<64x8xf32>
    %c0_8 = arith.constant 0 : index
    %c0_9 = arith.constant 0 : index
    %13 = vector.load %arg5[%c0_8, %c0_9] : memref<64x1xf32, #tpu.memory_space<vmem>>, vector<64x1xf32>
    %14 = vector.broadcast %13 : vector<64x1xf32> to vector<64x8xf32>
    %15 = arith.addf %12, %14 : vector<64x8xf32>
    %cst_10 = arith.constant 0.000000e+00 : f32
    %16 = vector.broadcast %cst_10 : f32 to vector<64x8xf32>
    %17 = arith.maximumf %15, %16 : vector<64x8xf32>
    %18 = vector.extract_strided_slice %11 {offsets = [64, 0], sizes = [1, 8], strides = [1, 1]} : vector<65x8xf32> to vector<1x8xf32>
    %c0_11 = arith.constant 0 : index
    %c0_12 = arith.constant 0 : index
    %19 = vector.load %arg6[%c0_11, %c0_12] : memref<64x1xf32, #tpu.memory_space<vmem>>, vector<64x1xf32>
    %20 = vector.broadcast %19 : vector<64x1xf32> to vector<64x8xf32>
    %21 = arith.mulf %17, %20 : vector<64x8xf32>
    %cst_13 = arith.constant dense<0.000000e+00> : vector<8xf32>
    %22 = vector.multi_reduction <add>, %21, %cst_13 [0] : vector<64x8xf32> to vector<8xf32>
    %23 = vector.shape_cast %22 : vector<8xf32> to vector<1x8xf32>
    %24 = arith.addf %23, %18 : vector<1x8xf32>
    %c0_14 = arith.constant 0 : index
    %c0_15 = arith.constant 0 : index
    %25 = vector.load %arg7[%c0_14, %c0_15] : memref<1x1xf32, #tpu.memory_space<vmem>>, vector<1x1xf32>
    %26 = vector.broadcast %25 : vector<1x1xf32> to vector<1x8xf32>
    %27 = arith.addf %24, %26 : vector<1x8xf32>
    %c0_16 = arith.constant 0 : index
    %c0_17 = arith.constant 0 : index
    %28 = vector.load %arg8[%c0_16, %c0_17] : memref<1x8xf32, #tpu.memory_space<vmem>>, vector<1x8xf32>
    tpu.vector_store %arg8[%c0_16, %c0_17], %27 {strides = array<i32>} : memref<1x8xf32, #tpu.memory_space<vmem>>, vector<1x8xf32>,
    return
  }
  func.func @transform_0(%arg0: i32) -> (i32, i32) {
    %c0_i32 = arith.constant 0 : i32
    %c0_i32_0 = arith.constant 0 : i32
    return %c0_i32, %arg0 : i32, i32
  }
  func.func @transform_1(%arg0: i32) -> (i32, i32) {
    %c0_i32 = arith.constant 0 : i32
    %c0_i32_0 = arith.constant 0 : i32
    return %arg0, %c0_i32 : i32, i32
  }
  func.func @transform_2(%arg0: i32) -> (i32, i32) {
    %c0_i32 = arith.constant 0 : i32
    %c0_i32_0 = arith.constant 0 : i32
    %c0_i32_1 = arith.constant 0 : i32
    return %c0_i32, %c0_i32_0 : i32, i32
  }
  func.func @transform_3(%arg0: i32) -> (i32, i32) {
    %c0_i32 = arith.constant 0 : i32
    %c0_i32_0 = arith.constant 0 : i32
    %c0_i32_1 = arith.constant 0 : i32
    return %c0_i32, %c0_i32_0 : i32, i32
  }
  func.func @transform_4(%arg0: i32) -> (i32, i32) {
    %c0_i32 = arith.constant 0 : i32
    %c0_i32_0 = arith.constant 0 : i32
    %c0_i32_1 = arith.constant 0 : i32
    return %c0_i32, %c0_i32_0 : i32, i32
  }
  func.func @transform_5(%arg0: i32) -> (i32, i32) {
    %c0_i32 = arith.constant 0 : i32
    %c0_i32_0 = arith.constant 0 : i32
    %c0_i32_1 = arith.constant 0 : i32
    return %c0_i32, %c0_i32_0 : i32, i32
  }
  func.func @transform_6(%arg0: i32) -> (i32, i32) {
    %c0_i32 = arith.constant 0 : i32
    %c0_i32_0 = arith.constant 0 : i32
    %c0_i32_1 = arith.constant 0 : i32
    return %c0_i32, %c0_i32_0 : i32, i32
  }
  func.func @transform_7(%arg0: i32) -> (i32, i32) {
    %c0_i32 = arith.constant 0 : i32
    %c0_i32_0 = arith.constant 0 : i32
    return %c0_i32, %arg0 : i32, i32
  }
}

</mosaic_0001>

<llo_original>
// kernel: literal_embeddings_forward.1
$region0: #{literal_embeddings_forward.1}
  #allocation0 [shape = 'u32[]', space=smem, size = 0x4, offset = 0x4, fixed_abs, tag = 'smem constant byte address 0x4 - core index']
  #allocation1 [shape = 'u32[144,128]{1,0:T(1,128)}', space=vmem, size = 0x12000, scoped, tag = 'internal scratch']
  #allocation2 [shape = 'f32[1,1]{1,0:T(1,128)S(1)}', space=vmem, size = 0x200, scoped, tag = 'scoped memory for literal_embeddings_forward.1']
  %s0 = inlined_call_operand.vmem [shape: s32[1,8], index: 0, kind: input, shape index: {}]
  %s1 = inlined_call_operand.vmem [shape: f32[8,32], index: 1, kind: input, shape index: {}]
  %s2 = inlined_call_operand.vmem [shape: f32[65,32], index: 2, kind: input, shape index: {}]
  %s3 = inlined_call_operand.vmem [shape: f32[65,6], index: 3, kind: input, shape index: {}]
  %s4 = inlined_call_operand.vmem [shape: f32[64,1], index: 4, kind: input, shape index: {}]
  %s5 = inlined_call_operand.vmem [shape: f32[64,1], index: 5, kind: input, shape index: {}]
  %s6 = inlined_call_operand.<no memory space> [shape: f32[1,1], index: 6, kind: input, shape index: {}]
  %s7 = inlined_call_operand.hbm [shape: f32[1,8], index: 7, kind: output, shape index: {}]
  %s8 = sld [smem:[#allocation0]]
  $region38: #{literal_embeddings_forward.1} parent=0
    _
  %s10 = ssub.s32 1, %s8
  %s11 = scalar_select 0, %s10, %s8
  %v12 = vstv %s6
  %13 = vst [vmem:[#allocation2] sm:$0x1] %v12
  $region1: #{literal_embeddings_forward.1} parent=0
    #allocation3 [shape = 'u8[512]{0}', space=vmem, size = 0x400, scoped, tag = 'output window, operand 0, single buffered']
    #allocation4 [shape = 's32[1]{0}', space=sflag, size = 0x4, scoped, tag = 'scoped memory for literal_embeddings_forward.1']
    %14 = vsyncpa [#allocation4], 0
    // Predicated region
    $region2: #{literal_embeddings_forward.1} parent=1 // pred_check
      _
    $region3: #{literal_embeddings_forward.1} parent=1 // pred_check_branch
      %16 = sbr.rel (0) target = $region5
    $region4: #{literal_embeddings_forward.1} parent=1 // pred_region
      _
    $region5: #{literal_embeddings_forward.1} parent=1 // pred_fallthru
      _
    // Predicated region
    $region6: #{literal_embeddings_forward.1} parent=1 // pred_check
      _
    $region7: #{literal_embeddings_forward.1} parent=1 // pred_check_branch
      %18 = sbr.rel (0) target = $region9
    $region8: #{literal_embeddings_forward.1} parent=1 // pred_region
      _
    $region9: #{literal_embeddings_forward.1} parent=1 // pred_fallthru
      _
    // Predicated region
    $region10: #{literal_embeddings_forward.1} parent=1 // pred_check
      _
    $region11: #{literal_embeddings_forward.1} parent=1 // pred_check_branch
      %20 = sbr.rel (0) target = $region13
    $region12: #{literal_embeddings_forward.1} parent=1 // pred_region
      _
    $region13: #{literal_embeddings_forward.1} parent=1 // pred_fallthru
      _
    // Predicated region
    $region14: #{literal_embeddings_forward.1} parent=1 // pred_check
      _
    $region15: #{literal_embeddings_forward.1} parent=1 // pred_check_branch
      %22 = sbr.rel (0) target = $region17
    $region16: #{literal_embeddings_forward.1} parent=1 // pred_region
      _
    $region17: #{literal_embeddings_forward.1} parent=1 // pred_fallthru
      _
    // Predicated region
    $region18: #{literal_embeddings_forward.1} parent=1 // pred_check
      _
    $region19: #{literal_embeddings_forward.1} parent=1 // pred_check_branch
      %24 = sbr.rel (0) target = $region21
    $region20: #{literal_embeddings_forward.1} parent=1 // pred_region
      _
    $region21: #{literal_embeddings_forward.1} parent=1 // pred_fallthru
      _
    // Predicated region
    $region22: #{literal_embeddings_forward.1} parent=1 // pred_check
      _
    $region23: #{literal_embeddings_forward.1} parent=1 // pred_check_branch
      %26 = sbr.rel (0) target = $region25
    $region24: #{literal_embeddings_forward.1} parent=1 // pred_region
      _
    $region25: #{literal_embeddings_forward.1} parent=1 // pred_fallthru
      _
    // Predicated region
    $region26: #{literal_embeddings_forward.1} parent=1 // pred_check
      _
    $region27: #{literal_embeddings_forward.1} parent=1 // pred_check_branch
      %28 = sbr.rel (0) target = $region29
    $region28: #{literal_embeddings_forward.1} parent=1 // pred_region
      _
    $region29: #{literal_embeddings_forward.1} parent=1 // pred_fallthru
      _
    %v29 = vld [vmem:[%s0] sm:$0x1]
    %v30 = vlaneseq
    %v31 = vshrl.u32 %v30, 7
    %v32 = vlaneseq
    %v33 = vshrl.u32 %v32, 7
    %v34 = vsub.s32 0, %v33
    %v35 = vrot.slane %v29, %v34
    %vm36 = vcmp.eq.s32.totalorder %v31, %v35
    %v37 = vsel %vm36, 1, 0
    %v38 = vcvt.s32.f32 %v37
    %v39 = vld [vmem:[%s2] sm:$0xff]
    %v40 = vld [vmem:[%s2 + $0x8] sm:$0xff]
    %v41 = vld [vmem:[%s2 + $0x10] sm:$0xff]
    %v42 = vld [vmem:[%s2 + $0x18] sm:$0xff]
    %v43 = vld [vmem:[%s2 + $0x20] sm:$0xff]
    %v44 = vld [vmem:[%s2 + $0x28] sm:$0xff]
    %v45 = vld [vmem:[%s2 + $0x30] sm:$0xff]
    %v46 = vld [vmem:[%s2 + $0x38] sm:$0xff]
    %v47 = vld [vmem:[%s2 + $0x40] sm:$0x1]
    %v48 = vld [vmem:[%s1] sm:$0xff]
    %v49 = vld [vmem:[%s3] sm:$0xff]
    %v50 = vld [vmem:[%s3 + $0x8] sm:$0xff]
    %v51 = vld [vmem:[%s3 + $0x10] sm:$0xff]
    %v52 = vld [vmem:[%s3 + $0x18] sm:$0xff]
    %v53 = vld [vmem:[%s3 + $0x20] sm:$0xff]
    %v54 = vld [vmem:[%s3 + $0x28] sm:$0xff]
    %v55 = vld [vmem:[%s3 + $0x30] sm:$0xff]
    %v56 = vld [vmem:[%s3 + $0x38] sm:$0xff]
    %v57 = vld [vmem:[%s3 + $0x40] sm:$0x1]
    %vm58 = vcmask 48128
    %v60 = vsel %vm58, %v49, 0
    %v63 = vsel %vm58, %v50, 0
    %v66 = vsel %vm58, %v51, 0
    %v69 = vsel %vm58, %v52, 0
    %v72 = vsel %vm58, %v53, 0
    %v75 = vsel %vm58, %v54, 0
    %v78 = vsel %vm58, %v55, 0
    %v81 = vsel %vm58, %v56, 0
    %v84 = vsel %vm58, %v57, 0
    %vm86 = vcmask 1045504
    %v88 = vsel %vm86, %v38, 0
    %90 = vmatprep.subr.mxu0 0.0
    %91 = vmatpush1.msra.mxu0 %v88
    %92 = vmatprep.subr.mxu0 0.0
    %93 = vmatpush1.msra.mxu0 0.0
    %94 = vmatprep.subr.mxu0 0.0
    %95 = vmatpush1.msra.mxu0 0.0
    %96 = vmatprep.subr.mxu0 0.0
    %97 = vmatpush1.msra.mxu0 0.0
    %98 = vmatprep.subr.mxu0 0.0
    %99 = vmatpush1.msra.mxu0 0.0
    %100 = vmatprep.subr.mxu0 0.0
    %101 = vmatpush1.msra.mxu0 0.0
    %102 = vmatprep.subr.mxu0 0.0
    %103 = vmatpush1.msra.mxu0 0.0
    %104 = vmatprep.subr.mxu0 0.0
    %105 = vmatpush1.msra.mxu0 0.0
    %106 = vmatprep.subr.mxu0 0.0
    %107 = vmatpush1.msra.mxu0 0.0
    %108 = vmatprep.subr.mxu0 0.0
    %109 = vmatpush1.msra.mxu0 0.0
    %110 = vmatprep.subr.mxu0 0.0
    %111 = vmatpush1.msra.mxu0 0.0
    %112 = vmatprep.subr.mxu0 0.0
    %113 = vmatpush1.msra.mxu0 0.0
    %114 = vmatprep.subr.mxu0 0.0
    %115 = vmatpush1.msra.mxu0 0.0
    %116 = vmatprep.subr.mxu0 0.0
    %117 = vmatpush1.msra.mxu0 0.0
    %118 = vmatprep.subr.mxu0 0.0
    %119 = vmatpush1.msra.mxu0 0.0
    %120 = vmatprep.subr.mxu0 0.0
    %121 = vmatpush1.msra.mxu0 0.0
    %122 = vmatprep.subr.mxu0 0.0
    %123 = vmatpush1.msra.mxu0 0.0
    %124 = vmatprep.subr.mxu0 0.0
    %125 = vmatpush1.msra.mxu0 0.0
    %126 = vmatprep.subr.mxu0 0.0
    %127 = vmatpush1.msra.mxu0 0.0
    %128 = vmatprep.subr.mxu0 0.0
    %129 = vmatpush1.msra.mxu0 0.0
    %130 = vmatprep.subr.mxu0 0.0
    %131 = vmatpush1.msra.mxu0 0.0
    %132 = vmatprep.subr.mxu0 0.0
    %133 = vmatpush1.msra.mxu0 0.0
    %134 = vmatprep.subr.mxu0 0.0
    %135 = vmatpush1.msra.mxu0 0.0
    %136 = vmatprep.subr.mxu0 0.0
    %137 = vmatpush1.msra.mxu0 0.0
    %138 = vmatprep.subr.mxu0 0.0
    %139 = vmatpush1.msra.mxu0 0.0
    %140 = vmatprep.subr.mxu0 0.0
    %141 = vmatpush1.msra.mxu0 0.0
    %142 = vmatprep.subr.mxu0 0.0
    %143 = vmatpush1.msra.mxu0 0.0
    %144 = vmatprep.subr.mxu0 0.0
    %145 = vmatpush1.msra.mxu0 0.0
    %146 = vmatprep.subr.mxu0 0.0
    %147 = vmatpush1.msra.mxu0 0.0
    %148 = vmatprep.subr.mxu0 0.0
    %149 = vmatpush1.msra.mxu0 0.0
    %150 = vmatprep.subr.mxu0 0.0
    %151 = vmatpush1.msra.mxu0 0.0
    %152 = vmatprep.subr.mxu0 0.0
    %153 = vmatpush1.msra.mxu0 0.0
    %154 = vmatprep.mubr.f32.mxu0 0.0
    %155 = vmatmul.mubr.f32.gmra.mrb[0].mxu0 %v60
    %v156 = vpop.f32.mrb[0].mxu0
    %v157 = vadd.f32 0.0, %v156
    %v158 = vpop.f32.mrb[0].mxu0
    %159 = vmatprep.mubr.f32.mxu0 0.0
    %160 = vmatmul.mubr.f32.gmra.mrb[0].mxu0 %v63
    %v161 = vpop.f32.mrb[0].mxu0
    %v162 = vadd.f32 0.0, %v161
    %v163 = vpop.f32.mrb[0].mxu0
    %164 = vmatprep.mubr.f32.mxu0 0.0
    %165 = vmatmul.mubr.f32.gmra.mrb[0].mxu0 %v66
    %v166 = vpop.f32.mrb[0].mxu0
    %v167 = vadd.f32 0.0, %v166
    %v168 = vpop.f32.mrb[0].mxu0
    %169 = vmatprep.mubr.f32.mxu0 0.0
    %170 = vmatmul.mubr.f32.gmra.mrb[0].mxu0 %v69
    %v171 = vpop.f32.mrb[0].mxu0
    %v172 = vadd.f32 0.0, %v171
    %v173 = vpop.f32.mrb[0].mxu0
    %174 = vmatprep.mubr.f32.mxu0 0.0
    %175 = vmatmul.mubr.f32.gmra.mrb[0].mxu0 %v72
    %v176 = vpop.f32.mrb[0].mxu0
    %v177 = vadd.f32 0.0, %v176
    %v178 = vpop.f32.mrb[0].mxu0
    %179 = vmatprep.mubr.f32.mxu0 0.0
    %180 = vmatmul.mubr.f32.gmra.mrb[0].mxu0 %v75
    %v181 = vpop.f32.mrb[0].mxu0
    %v182 = vadd.f32 0.0, %v181
    %v183 = vpop.f32.mrb[0].mxu0
    %184 = vmatprep.mubr.f32.mxu0 0.0
    %185 = vmatmul.mubr.f32.gmra.mrb[0].mxu0 %v78
    %v186 = vpop.f32.mrb[0].mxu0
    %v187 = vadd.f32 0.0, %v186
    %v188 = vpop.f32.mrb[0].mxu0
    %189 = vmatprep.mubr.f32.mxu0 0.0
    %190 = vmatmul.mubr.f32.gmra.mrb[0].mxu0 %v81
    %v191 = vpop.f32.mrb[0].mxu0
    %v192 = vadd.f32 0.0, %v191
    %v193 = vpop.f32.mrb[0].mxu0
    %194 = vmatprep.mubr.f32.mxu0 0.0
    %195 = vmatmul.mubr.f32.gmra.mrb[0].mxu0 %v84
    %v196 = vpop.f32.mrb[0].mxu0
    %v197 = vadd.f32 0.0, %v196
    %v198 = vpop.f32.mrb[0].mxu0
    %199 = vdwg.mxu0
    %vm200 = vcmask 261120
    %v202 = vsel %vm200, %v39, 0
    %v205 = vsel %vm200, %v40, 0
    %v208 = vsel %vm200, %v41, 0
    %v211 = vsel %vm200, %v42, 0
    %v214 = vsel %vm200, %v43, 0
    %v217 = vsel %vm200, %v44, 0
    %v220 = vsel %vm200, %v45, 0
    %v223 = vsel %vm200, %v46, 0
    %v226 = vsel %vm200, %v47, 0
    %v229 = vsel %vm200, %v48, 0
    %231 = vmatprep.subr.mxu0 0.0
    %232 = vmatpush1.xpose.msra.mxu0 %v229
    %233 = vmatprep.subr.mxu0 0.0
    %234 = vmatpush1.xpose.msra.mxu0 0.0
    %235 = vmatprep.subr.mxu0 0.0
    %236 = vmatpush1.xpose.msra.mxu0 0.0
    %237 = vmatprep.subr.mxu0 0.0
    %238 = vmatpush1.xpose.msra.mxu0 0.0
    %239 = vmatprep.subr.mxu0 0.0
    %240 = vmatpush1.xpose.msra.mxu0 0.0
    %241 = vmatprep.subr.mxu0 0.0
    %242 = vmatpush1.xpose.msra.mxu0 0.0
    %243 = vmatprep.subr.mxu0 0.0
    %244 = vmatpush1.xpose.msra.mxu0 0.0
    %245 = vmatprep.subr.mxu0 0.0
    %246 = vmatpush1.xpose.msra.mxu0 0.0
    %247 = vmatprep.subr.mxu0 0.0
    %248 = vmatpush1.xpose.msra.mxu0 0.0
    %249 = vmatprep.subr.mxu0 0.0
    %250 = vmatpush1.xpose.msra.mxu0 0.0
    %251 = vmatprep.subr.mxu0 0.0
    %252 = vmatpush1.xpose.msra.mxu0 0.0
    %253 = vmatprep.subr.mxu0 0.0
    %254 = vmatpush1.xpose.msra.mxu0 0.0
    %255 = vmatprep.subr.mxu0 0.0
    %256 = vmatpush1.xpose.msra.mxu0 0.0
    %257 = vmatprep.subr.mxu0 0.0
    %258 = vmatpush1.xpose.msra.mxu0 0.0
    %259 = vmatprep.subr.mxu0 0.0
    %260 = vmatpush1.xpose.msra.mxu0 0.0
    %261 = vmatprep.subr.mxu0 0.0
    %262 = vmatpush1.xpose.msra.mxu0 0.0
    %263 = vmatprep.subr.mxu0 0.0
    %264 = vmatpush1.xpose.msra.mxu0 0.0
    %265 = vmatprep.subr.mxu0 0.0
    %266 = vmatpush1.xpose.msra.mxu0 0.0
    %267 = vmatprep.subr.mxu0 0.0
    %268 = vmatpush1.xpose.msra.mxu0 0.0
    %269 = vmatprep.subr.mxu0 0.0
    %270 = vmatpush1.xpose.msra.mxu0 0.0
    %271 = vmatprep.subr.mxu0 0.0
    %272 = vmatpush1.xpose.msra.mxu0 0.0
    %273 = vmatprep.subr.mxu0 0.0
    %274 = vmatpush1.xpose.msra.mxu0 0.0
    %275 = vmatprep.subr.mxu0 0.0
    %276 = vmatpush1.xpose.msra.mxu0 0.0
    %277 = vmatprep.subr.mxu0 0.0
    %278 = vmatpush1.xpose.msra.mxu0 0.0
    %279 = vmatprep.subr.mxu0 0.0
    %280 = vmatpush1.xpose.msra.mxu0 0.0
    %281 = vmatprep.subr.mxu0 0.0
    %282 = vmatpush1.xpose.msra.mxu0 0.0
    %283 = vmatprep.subr.mxu0 0.0
    %284 = vmatpush1.xpose.msra.mxu0 0.0
    %285 = vmatprep.subr.mxu0 0.0
    %286 = vmatpush1.xpose.msra.mxu0 0.0
    %287 = vmatprep.subr.mxu0 0.0
    %288 = vmatpush1.xpose.msra.mxu0 0.0
    %289 = vmatprep.subr.mxu0 0.0
    %290 = vmatpush1.xpose.msra.mxu0 0.0
    %291 = vmatprep.subr.mxu0 0.0
    %292 = vmatpush1.xpose.msra.mxu0 0.0
    %293 = vmatprep.subr.mxu0 0.0
    %294 = vmatpush1.xpose.msra.mxu0 0.0
    %295 = vmatprep.mubr.f32.mxu0 0.0
    %296 = vmatmul.mubr.f32.gmra.mrb[0].mxu0 %v202
    %v297 = vpop.f32.mrb[0].mxu0
    %v298 = vadd.f32 %v157, %v297
    %v299 = vpop.f32.mrb[0].mxu0
    %300 = vmatprep.mubr.f32.mxu0 0.0
    %301 = vmatmul.mubr.f32.gmra.mrb[0].mxu0 %v205
    %v302 = vpop.f32.mrb[0].mxu0
    %v303 = vadd.f32 %v162, %v302
    %v304 = vpop.f32.mrb[0].mxu0
    %305 = vmatprep.mubr.f32.mxu0 0.0
    %306 = vmatmul.mubr.f32.gmra.mrb[0].mxu0 %v208
    %v307 = vpop.f32.mrb[0].mxu0
    %v308 = vadd.f32 %v167, %v307
    %v309 = vpop.f32.mrb[0].mxu0
    %310 = vmatprep.mubr.f32.mxu0 0.0
    %311 = vmatmul.mubr.f32.gmra.mrb[0].mxu0 %v211
    %v312 = vpop.f32.mrb[0].mxu0
    %v313 = vadd.f32 %v172, %v312
    %v314 = vpop.f32.mrb[0].mxu0
    %315 = vmatprep.mubr.f32.mxu0 0.0
    %316 = vmatmul.mubr.f32.gmra.mrb[0].mxu0 %v214
    %v317 = vpop.f32.mrb[0].mxu0
    %v318 = vadd.f32 %v177, %v317
    %v319 = vpop.f32.mrb[0].mxu0
    %320 = vmatprep.mubr.f32.mxu0 0.0
    %321 = vmatmul.mubr.f32.gmra.mrb[0].mxu0 %v217
    %v322 = vpop.f32.mrb[0].mxu0
    %v323 = vadd.f32 %v182, %v322
    %v324 = vpop.f32.mrb[0].mxu0
    %325 = vmatprep.mubr.f32.mxu0 0.0
    %326 = vmatmul.mubr.f32.gmra.mrb[0].mxu0 %v220
    %v327 = vpop.f32.mrb[0].mxu0
    %v328 = vadd.f32 %v187, %v327
    %v329 = vpop.f32.mrb[0].mxu0
    %330 = vmatprep.mubr.f32.mxu0 0.0
    %331 = vmatmul.mubr.f32.gmra.mrb[0].mxu0 %v223
    %v332 = vpop.f32.mrb[0].mxu0
    %v333 = vadd.f32 %v192, %v332
    %v334 = vpop.f32.mrb[0].mxu0
    %335 = vmatprep.mubr.f32.mxu0 0.0
    %336 = vmatmul.mubr.f32.gmra.mrb[0].mxu0 %v226
    %v337 = vpop.f32.mrb[0].mxu0
    %v338 = vadd.f32 %v197, %v337
    %v339 = vpop.f32.mrb[0].mxu0
    %340 = vdwg.mxu0
    %v341 = vld [vmem:[%s4] sm:$0xff]
    %v342 = vld [vmem:[%s4 + $0x8] sm:$0xff]
    %v343 = vld [vmem:[%s4 + $0x10] sm:$0xff]
    %v344 = vld [vmem:[%s4 + $0x18] sm:$0xff]
    %v345 = vld [vmem:[%s4 + $0x20] sm:$0xff]
    %v346 = vld [vmem:[%s4 + $0x28] sm:$0xff]
    %v347 = vld [vmem:[%s4 + $0x30] sm:$0xff]
    %v348 = vld [vmem:[%s4 + $0x38] sm:$0xff]
    %350 = vset.pattern.permute.xlu0 0
    %351 = vperm.xlu0 %350, %v341
    %v352 = vpop.permute.xlu0 %351
    %355 = vset.pattern.permute.xlu0 0
    %356 = vperm.xlu0 %355, %v342
    %v357 = vpop.permute.xlu0 %356
    %360 = vset.pattern.permute.xlu0 0
    %361 = vperm.xlu0 %360, %v343
    %v362 = vpop.permute.xlu0 %361
    %365 = vset.pattern.permute.xlu0 0
    %366 = vperm.xlu0 %365, %v344
    %v367 = vpop.permute.xlu0 %366
    %370 = vset.pattern.permute.xlu0 0
    %371 = vperm.xlu0 %370, %v345
    %v372 = vpop.permute.xlu0 %371
    %375 = vset.pattern.permute.xlu0 0
    %376 = vperm.xlu0 %375, %v346
    %v377 = vpop.permute.xlu0 %376
    %380 = vset.pattern.permute.xlu0 0
    %381 = vperm.xlu0 %380, %v347
    %v382 = vpop.permute.xlu0 %381
    %385 = vset.pattern.permute.xlu0 0
    %386 = vperm.xlu0 %385, %v348
    %v387 = vpop.permute.xlu0 %386
    %v389 = vadd.f32 %v298, %v352
    %v390 = vadd.f32 %v303, %v357
    %v391 = vadd.f32 %v308, %v362
    %v392 = vadd.f32 %v313, %v367
    %v393 = vadd.f32 %v318, %v372
    %v394 = vadd.f32 %v323, %v377
    %v395 = vadd.f32 %v328, %v382
    %v396 = vadd.f32 %v333, %v387
    %v397 = vmax.f32 %v389, 0.0
    %v398 = vmax.f32 %v390, 0.0
    %v399 = vmax.f32 %v391, 0.0
    %v400 = vmax.f32 %v392, 0.0
    %v401 = vmax.f32 %v393, 0.0
    %v402 = vmax.f32 %v394, 0.0
    %v403 = vmax.f32 %v395, 0.0
    %v404 = vmax.f32 %v396, 0.0
    %v405 = vld [vmem:[%s5] sm:$0xff]
    %v406 = vld [vmem:[%s5 + $0x8] sm:$0xff]
    %v407 = vld [vmem:[%s5 + $0x10] sm:$0xff]
    %v408 = vld [vmem:[%s5 + $0x18] sm:$0xff]
    %v409 = vld [vmem:[%s5 + $0x20] sm:$0xff]
    %v410 = vld [vmem:[%s5 + $0x28] sm:$0xff]
    %v411 = vld [vmem:[%s5 + $0x30] sm:$0xff]
    %v412 = vld [vmem:[%s5 + $0x38] sm:$0xff]
    %414 = vset.pattern.permute.xlu0 0
    %415 = vperm.xlu0 %414, %v405
    %v416 = vpop.permute.xlu0 %415
    %419 = vset.pattern.permute.xlu0 0
    %420 = vperm.xlu0 %419, %v406
    %v421 = vpop.permute.xlu0 %420
    %424 = vset.pattern.permute.xlu0 0
    %425 = vperm.xlu0 %424, %v407
    %v426 = vpop.permute.xlu0 %425
    %429 = vset.pattern.permute.xlu0 0
    %430 = vperm.xlu0 %429, %v408
    %v431 = vpop.permute.xlu0 %430
    %434 = vset.pattern.permute.xlu0 0
    %435 = vperm.xlu0 %434, %v409
    %v436 = vpop.permute.xlu0 %435
    %439 = vset.pattern.permute.xlu0 0
    %440 = vperm.xlu0 %439, %v410
    %v441 = vpop.permute.xlu0 %440
    %444 = vset.pattern.permute.xlu0 0
    %445 = vperm.xlu0 %444, %v411
    %v446 = vpop.permute.xlu0 %445
    %449 = vset.pattern.permute.xlu0 0
    %450 = vperm.xlu0 %449, %v412
    %v451 = vpop.permute.xlu0 %450
    %v453 = vmul.f32 %v397, %v416
    %v454 = vmul.f32 %v398, %v421
    %v455 = vmul.f32 %v399, %v426
    %v456 = vmul.f32 %v400, %v431
    %v457 = vmul.f32 %v401, %v436
    %v458 = vmul.f32 %v402, %v441
    %v459 = vmul.f32 %v403, %v446
    %v460 = vmul.f32 %v404, %v451
    %vm461 = vcmask 64512
    %v462 = vsel %vm461, %v453, 0.0
    %v463 = vsel %vm461, %v454, 0.0
    %v464 = vadd.f32 %v462, %v463
    %v465 = vsel %vm461, %v455, 0.0
    %v466 = vadd.f32 %v464, %v465
    %v467 = vsel %vm461, %v456, 0.0
    %v468 = vadd.f32 %v466, %v467
    %v469 = vsel %vm461, %v457, 0.0
    %v470 = vadd.f32 %v468, %v469
    %v471 = vsel %vm461, %v458, 0.0
    %v472 = vadd.f32 %v470, %v471
    %v473 = vsel %vm461, %v459, 0.0
    %v474 = vadd.f32 %v472, %v473
    %v475 = vsel %vm461, %v460, 0.0
    %v476 = vadd.f32 %v474, %v475
    %v477 = vrot.slane %v476, 4
    %v478 = vadd.f32 %v476, %v477
    %v479 = vrot.slane %v478, 2
    %v480 = vadd.f32 %v478, %v479
    %v481 = vrot.slane %v480, 1
    %v482 = vadd.f32 %v480, %v481
    %v483 = vadd.f32 %v482, %v338
    %v484 = vld [vmem:[#allocation2] sm:$0x1]
    %486 = vset.pattern.permute.xlu0 0
    %487 = vperm.xlu0 %486, %v484
    %v488 = vpop.permute.xlu0 %487
    %v490 = vlaneseq
    %v491 = vshrl.u32 %v490, 7
    %v492 = vsub.s32 0, %v491
    %v493 = vrot.slane %v488, %v492
    %v494 = vadd.f32 %v483, %v493
    %vm495 = vcmask 57344
    %496 = vst.msk [vmem:[#allocation3] sm:$0x1] %vm495, %v494
    // Predicated region
    $region30: #{literal_embeddings_forward.1} parent=1 // pred_check
      _
    $region31: #{literal_embeddings_forward.1} parent=1 // pred_check_branch
      %498 = sbr.rel (0) target = $region33
    $region32: #{literal_embeddings_forward.1} parent=1 // pred_region
      %s500 = ssub.s32 16, 16
      %501 = vsyncadd [#allocation4], %s500
      %s503 = sshll.u32 [#allocation3], 4
      %s504 = int_to_ptr.vmem [resolvable:$true] %s503
      %506 = dma.vmem_to_hbm [thread:$0]  %s504, 16, %s7, [#allocation4]
    $region33: #{literal_embeddings_forward.1} parent=1 // pred_fallthru
      _
    // Predicated region
    $region34: #{literal_embeddings_forward.1} parent=1 // pred_check
      _
    $region35: #{literal_embeddings_forward.1} parent=1 // pred_check_branch
      %508 = sbr.rel (0) target = $region37
    $region36: #{literal_embeddings_forward.1} parent=1 // pred_region
      %509 = dma.done [#allocation4], 16
    $region37: #{literal_embeddings_forward.1} parent=1 // pred_fallthru
      _
    %510 = vsyncpa [#allocation4], 1

</llo_original>
